<compile_context>
chip_gen: v7x
topology: tpu7x:2x2x1
jax: 0.10.0
libtpu: 0.0.40
codegen_flags: <defaults>
</compile_context>

<pallas_src>
import jax
import jax.numpy as jnp
from jax.experimental import pallas as pl
from jax.experimental.pallas import tpu as pltpu


def _conv_out_len(t_in, k, stride, pad):
    return (t_in + 2 * pad - k) // stride + 1


# ---------------------------------------------------------------------------
# One-time host-side algebraic fusion of conv1 -> conv2 -> lin1 (eval mode).
# Valid only when T_in == 1 and conv2 collapses time back to 1 (the torch.squeeze
# path of the reference model); raises otherwise instead of silently mis-computing.
# ---------------------------------------------------------------------------
def fuse_params(params, *, K1, S1, K2, S2, T_in=1):
    """Returns (w_fused (Cin,L1), b_fused (L1,), wl2 (L1,), bl2 scalar) such that
    forward(x) == sigmoid(relu(x @ w_fused + b_fused) @ wl2 + bl2)."""
    w1, b1, w2, b2, wl1, bl1, wl2, bl2 = params            # PyTorch layouts
    C1, Cin, _ = w1.shape                                  # Conv1d weight: (O, I, K)
    C2 = w2.shape[0]
    T1 = _conv_out_len(T_in, K1, S1, 1)
    T2 = _conv_out_len(T1, K2, S2, 1)
    if T_in != 1 or T2 != 1:
        raise ValueError(
            "fused kernel assumes the time axis is 1 and conv2 collapses it back to 1 "
            f"(got T_in={T_in}, T2={T2})")

    # conv1 (padding=1): x-dependent weight for each of its T1 output time steps.
    A1 = []
    for t in range(T1):
        acc = jnp.zeros((Cin, C1), jnp.float32)
        for k in range(K1):
            p = t * S1 + k - 1
            if 0 <= p < T_in:
                acc = acc + w1[:, :, k].T                  # (Cin, C1)
        A1.append(acc)

    # conv2 output step 0 (padding=1): h2 = x @ Wx + b1 @ Wb1 + b2
    Wx = jnp.zeros((Cin, C2), jnp.float32)
    Wb1 = jnp.zeros((C1, C2), jnp.float32)
    for k in range(K2):
        p = k - 1
        if 0 <= p < T1:
            w2k = w2[:, :, k].T                            # (C1, C2)
            Wx = Wx + A1[p] @ w2k
            Wb1 = Wb1 + w2k

    # TODO(synk): nn.Dropout(p=drop) is identity (inference semantics); this fusion
    # would be invalid with training-mode dropout.
    w_fused = Wx @ wl1.T                                   # (Cin, L1)
    b_fused = (b1 @ Wb1 + b2) @ wl1.T + bl1                # (L1,)
    return (jnp.asarray(w_fused, jnp.float32),
            jnp.asarray(b_fused, jnp.float32),
            jnp.asarray(wl2, jnp.float32).reshape(-1),     # (L1,)
            float(jnp.asarray(bl2, jnp.float32).reshape(())))


def _pick_packed_tile(rows, cap=512):
    """Largest multiple-of-8 divisor of `rows` that is <= min(cap, rows//2) so the
    grid has >= 2 steps (v7x megacore); falls back to one full-extent block."""
    target = min(cap, max(rows // 2, 8))
    target -= target % 8
    for t in range(target, 7, -8):
        if rows % t == 0:
            return t
    return rows


def make_forward(fused_params, *, compute_dtype=jnp.float32, approx_sigmoid=True,
                 pack=None, tile_cap=512):
    """Returns a jitted forward(x: (B, input_size) f32) -> (B, 1) f32.

    compute_dtype=jnp.bfloat16 runs the MXU in bf16 on v6e/v7x (cast happens inside
    the kernel; x stays f32 in HBM; accumulation and all elementwise math stay f32,
    which is also the right choice for v5e).
    """
    w_fused, b_fused, wl2, bl2 = fused_params
    Cin, L1 = w_fused.shape
    if pack is None:
        pack = 128 // Cin if (Cin <= 128 and 128 % Cin == 0) else 8
    P = max(int(pack), 1)

    # One-time host-side re-layout: P consecutive batch rows share one vreg row.
    #   xp[j, p*Cin + c] = x[P*j + p, c]     zp[j, p*L1 + l] = z[P*j + p, l]
    w_bd = jax.scipy.linalg.block_diag(*([w_fused] * P)).astype(compute_dtype)  # (P*Cin, P*L1)
    b_row = jnp.tile(b_fused, P)[None, :]                                       # (1, P*L1) f32
    sel = jax.scipy.linalg.block_diag(*([wl2.reshape(L1, 1)] * P))              # (P*L1, P) f32, lin2 weight folded in
    bl2_c = float(bl2)                                                          # lin2 bias -> compile-time constant

    def kernel(x_ref, w_ref, b_ref, s_ref, o_ref):
        # x:(tb, P*Cin) f32   w:(P*Cin, P*L1)   b:(1, P*L1) f32   s:(P*L1, P) f32   o:(tb, P) f32
        x = x_ref[...].astype(compute_dtype)            # in-kernel cast (no wrapper astype)
        z = jnp.dot(x, w_ref[...], preferred_element_type=jnp.float32)
        z = jnp.maximum(z + b_ref[...], 0.0)            # bias + ReLU in f32
        # lin2 as a block-diagonal selector matmul -> per-original-row scalar, lane-packed.
        s = jnp.dot(z, s_ref[...], preferred_element_type=jnp.float32) + bl2_c
        # Numerically stable sigmoid; exp (and optionally the reciprocal) on the EUP slot.
        e = jnp.exp(-jnp.abs(s))
        r = pl.reciprocal(1.0 + e, approx=True) if approx_sigmoid else 1.0 / (1.0 + e)
        o_ref[...] = jnp.where(s >= 0.0, r, e * r).astype(o_ref.dtype)

    @jax.jit
    def forward(x):
        B, cin = x.shape
        assert cin == Cin, (cin, Cin)
        b_pad = -(-B // P) * P                           # static-shape (trace-time) padding
        if b_pad != B:
            x = jnp.concatenate([x, jnp.zeros((b_pad - B, Cin), x.dtype)], axis=0)
        rows = b_pad // P
        xp = x.reshape(rows, P * Cin)                    # contiguous rows -> free reshape
        tb = _pick_packed_tile(rows, tile_cap)

        out = pl.pallas_call(
            kernel,
            out_shape=jax.ShapeDtypeStruct((rows, P), jnp.float32),
            grid=(rows // tb,),
            in_specs=[
                pl.BlockSpec((tb, P * Cin), lambda i: (i, 0)),      # x tiles (auto double-buffered)
                pl.BlockSpec((P * Cin, P * L1), lambda i: (0, 0)),  # resident fused weight
                pl.BlockSpec((1, P * L1), lambda i: (0, 0)),        # resident bias row
                pl.BlockSpec((P * L1, P), lambda i: (0, 0)),        # resident selector (lin2)
            ],
            out_specs=pl.BlockSpec((tb, P), lambda i: (i, 0)),
            compiler_params=pltpu.CompilerParams(
                dimension_semantics=("parallel",)),      # batch tiles shard across v7x's 2 TCs
        )(xp, w_bd, b_row, sel)
        return out.reshape(b_pad, 1)[:B]

    return forward


# ---------------------------------------------------------------------------
# Pure-JAX reference reproducing the PyTorch forward exactly (unfused).
# ---------------------------------------------------------------------------
def ref_forward(x, params, *, S1, S2):
    w1, b1, w2, b2, wl1, bl1, wl2, bl2 = params
    X = x[:, None, :]                          # unsqueeze(1): (B, 1, input_size)
    X = jnp.transpose(X, (0, 2, 1))            # transpose(1,2): (B, input_size, 1)  [NCW]
    dn = ('NCH', 'OIH', 'NCH')
    y = jax.lax.conv_general_dilated(X, w1, (S1,), [(1, 1)], dimension_numbers=dn)
    y = y + b1[None, :, None]
    y = jax.lax.conv_general_dilated(y, w2, (S2,), [(1, 1)], dimension_numbers=dn)
    y = y + b2[None, :, None]
    z = jnp.squeeze(y, axis=-1)                # (B, C2)
    z = z @ wl1.T + bl1                        # dropout = identity in eval mode
    z = jnp.maximum(z, 0.0)
    z = z @ wl2.T + bl2
    return jax.nn.sigmoid(z)


def init_params(key, input_size, C1, C2, K1, K2, L1):
    ks = jax.random.split(key, 8)

    def u(k, shape, fan_in):
        bound = 1.0 / jnp.sqrt(fan_in)
        return jax.random.uniform(k, shape, jnp.float32, -bound, bound)

    w1 = u(ks[0], (C1, input_size, K1), input_size * K1)   # Conv1d weight: (O, I, K)
    b1 = u(ks[1], (C1,), input_size * K1)
    w2 = u(ks[2], (C2, C1, K2), C1 * K2)
    b2 = u(ks[3], (C2,), C1 * K2)
    wl1 = u(ks[4], (L1, C2), C2)                           # Linear weight: (out, in)
    bl1 = u(ks[5], (L1,), C2)
    wl2 = u(ks[6], (1, L1), L1)
    bl2 = u(ks[7], (1,), L1)
    return (w1, b1, w2, b2, wl1, bl1, wl2, bl2)


if __name__ == "__main__":
    # Small config consistent with the module's __init__.
    input_size = 16
    K1, S1, K2, S2 = 3, 1, 3, 1
    C1, C2, L1 = 32, 32, 32
    drop = 0.2                                  # eval mode -> identity

    key = jax.random.PRNGKey(0)
    kx, kp = jax.random.split(key)
    params = init_params(kp, input_size, C1, C2, K1, K2, L1)
    fused = fuse_params(params, K1=K1, S1=S1, K2=K2, S2=S2)

    # 1) f32 + exact sigmoid: bit-tight parity with the unfused reference.
    B = 256
    x = jax.random.normal(kx, (B, input_size), jnp.float32)
    ref = ref_forward(x, params, S1=S1, S2=S2)
    exact = make_forward(fused, approx_sigmoid=False)
    out = jax.block_until_ready(exact(x))
    assert out.shape == (B, 1)
    assert jnp.allclose(out, ref, atol=2e-5, rtol=2e-5)

    # 2) Default fast path (approximate EUP reciprocal in the sigmoid).
    fast = make_forward(fused)
    out_fast = jax.block_until_ready(fast(x))
    assert jnp.allclose(out_fast, ref, atol=1e-2, rtol=1e-2)

    # 3) Ragged batch: exercises the pad + single full-extent-block fallback.
    Br = 100
    xr = jax.random.normal(jax.random.fold_in(kx, 1), (Br, input_size), jnp.float32)
    out_r = jax.block_until_ready(fast(xr))
    ref_r = ref_forward(xr, params, S1=S1, S2=S2)
    assert out_r.shape == (Br, 1)
    assert jnp.allclose(out_r, ref_r, atol=1e-2, rtol=1e-2)

    # 4) bf16 MXU operands (v6e/v7x sweet spot); cast happens inside the kernel,
    #    x stays f32 in HBM; tolerance loosened accordingly.
    bf16 = make_forward(fused, compute_dtype=jnp.bfloat16)
    out_bf = jax.block_until_ready(bf16(x))
    assert jnp.allclose(out_bf, ref, atol=5e-2, rtol=5e-2)

    print("KERNEL_OK")
</pallas_src>

<mosaic_0001>
module attributes {stable_mosaic.version = 11 : i64} {
  func.func @kernel(%arg0: i32, %arg1: memref<16x128xf32, #tpu.memory_space<vmem>>, %arg2: memref<128x256xf32, #tpu.memory_space<vmem>>, %arg3: memref<1x256xf32, #tpu.memory_space<vmem>>, %arg4: memref<256x8xf32, #tpu.memory_space<vmem>>, %arg5: memref<16x8xf32, #tpu.memory_space<vmem>>) attributes {dimension_semantics = [#tpu.dimension_semantics<parallel>], iteration_bounds = array<i64: 2>, scalar_prefetch = 0 : i64, scratch_operands = 0 : i64, tpu.core_type = #tpu.core_type<tc>, window_params = [{transform_indices = @transform_0, window_bounds = array<i64: 16, 128>}, {pipeline_mode = #tpu.pipeline_mode<synchronous>, transform_indices = @transform_1, window_bounds = array<i64: 128, 256>}, {pipeline_mode = #tpu.pipeline_mode<synchronous>, transform_indices = @transform_2, window_bounds = array<i64: 1, 256>}, {pipeline_mode = #tpu.pipeline_mode<synchronous>, transform_indices = @transform_3, window_bounds = array<i64: 256, 8>}, {transform_indices = @transform_4, window_bounds = array<i64: 16, 8>}]} {
    %c0 = arith.constant 0 : index
    %c0_0 = arith.constant 0 : index
    %0 = vector.load %arg1[%c0, %c0_0] : memref<16x128xf32, #tpu.memory_space<vmem>>, vector<16x128xf32>
    %c0_1 = arith.constant 0 : index
    %c0_2 = arith.constant 0 : index
    %1 = vector.load %arg2[%c0_1, %c0_2] : memref<128x256xf32, #tpu.memory_space<vmem>>, vector<128x256xf32>
    %cst = arith.constant dense<0.000000e+00> : vector<16x256xf32>
    %2 = tpu.matmul %0, %1, %cst {dimension_numbers = #tpu.dot_dimension_numbers<[1], [0], [0], [1], [0, 0, 1, 1], [], []>} : vector<16x128xf32>, vector<128x256xf32>, vector<16x256xf32> -> vector<16x256xf32>
    %c0_3 = arith.constant 0 : index
    %c0_4 = arith.constant 0 : index
    %3 = vector.load %arg3[%c0_3, %c0_4] : memref<1x256xf32, #tpu.memory_space<vmem>>, vector<1x256xf32>
    %4 = vector.broadcast %3 : vector<1x256xf32> to vector<16x256xf32>
    %5 = arith.addf %2, %4 : vector<16x256xf32>
    %cst_5 = arith.constant 0.000000e+00 : f32
    %6 = vector.broadcast %cst_5 : f32 to vector<16x256xf32>
    %7 = arith.maximumf %5, %6 : vector<16x256xf32>
    %c0_6 = arith.constant 0 : index
    %c0_7 = arith.constant 0 : index
    %8 = vector.load %arg4[%c0_6, %c0_7] : memref<256x8xf32, #tpu.memory_space<vmem>>, vector<256x8xf32>
    %cst_8 = arith.constant dense<0.000000e+00> : vector<16x8xf32>
    %9 = tpu.matmul %7, %8, %cst_8 {dimension_numbers = #tpu.dot_dimension_numbers<[1], [0], [0], [1], [0, 0, 1, 1], [], []>} : vector<16x256xf32>, vector<256x8xf32>, vector<16x8xf32> -> vector<16x8xf32>
    %cst_9 = arith.constant -1.717200e-01 : f32
    %10 = vector.broadcast %cst_9 : f32 to vector<16x8xf32>
    %11 = arith.addf %9, %10 : vector<16x8xf32>
    %12 = math.absf %11 : vector<16x8xf32>
    %cst_10 = arith.constant 0.000000e+00 : f32
    %13 = vector.broadcast %cst_10 : f32 to vector<16x8xf32>
    %14 = arith.subf %13, %12 : vector<16x8xf32>
    %15 = math.exp %14 : vector<16x8xf32>
    %cst_11 = arith.constant 1.000000e+00 : f32
    %16 = vector.broadcast %cst_11 : f32 to vector<16x8xf32>
    %17 = arith.addf %16, %15 : vector<16x8xf32>
    %cst_12 = arith.constant 1.000000e+00 : f32
    %18 = vector.broadcast %cst_12 : f32 to vector<16x8xf32>
    %19 = arith.divf %18, %17 : vector<16x8xf32>
    %cst_13 = arith.constant 0.000000e+00 : f32
    %20 = vector.broadcast %cst_13 : f32 to vector<16x8xf32>
    %21 = arith.cmpf oge, %11, %20 : vector<16x8xf32>
    %22 = arith.mulf %15, %19 : vector<16x8xf32>
    %23 = arith.select %21, %19, %22 : vector<16x8xi1>, vector<16x8xf32>
    %c0_14 = arith.constant 0 : index
    %c0_15 = arith.constant 0 : index
    %24 = vector.load %arg5[%c0_14, %c0_15] : memref<16x8xf32, #tpu.memory_space<vmem>>, vector<16x8xf32>
    tpu.vector_store %arg5[%c0_14, %c0_15], %23 {strides = array<i32>} : memref<16x8xf32, #tpu.memory_space<vmem>>, vector<16x8xf32>,
    return
  }
  func.func @transform_0(%arg0: i32) -> (i32, i32) {
    %c0_i32 = arith.constant 0 : i32
    %c0_i32_0 = arith.constant 0 : i32
    return %arg0, %c0_i32 : i32, i32
  }
  func.func @transform_1(%arg0: i32) -> (i32, i32) {
    %c0_i32 = arith.constant 0 : i32
    %c0_i32_0 = arith.constant 0 : i32
    %c0_i32_1 = arith.constant 0 : i32
    return %c0_i32, %c0_i32_0 : i32, i32
  }
  func.func @transform_2(%arg0: i32) -> (i32, i32) {
    %c0_i32 = arith.constant 0 : i32
    %c0_i32_0 = arith.constant 0 : i32
    %c0_i32_1 = arith.constant 0 : i32
    return %c0_i32, %c0_i32_0 : i32, i32
  }
  func.func @transform_3(%arg0: i32) -> (i32, i32) {
    %c0_i32 = arith.constant 0 : i32
    %c0_i32_0 = arith.constant 0 : i32
    %c0_i32_1 = arith.constant 0 : i32
    return %c0_i32, %c0_i32_0 : i32, i32
  }
  func.func @transform_4(%arg0: i32) -> (i32, i32) {
    %c0_i32 = arith.constant 0 : i32
    %c0_i32_0 = arith.constant 0 : i32
    return %arg0, %c0_i32 : i32, i32
  }
}

</mosaic_0001>

<llo_original>
// kernel: forward.1
$region0: #{forward.1}
  #allocation0 [shape = 'u32[]', space=smem, size = 0x4, offset = 0x4, fixed_abs, tag = 'smem constant byte address 0x4 - core index']
  #allocation1 [shape = 'u32[144,128]{1,0:T(1,128)}', space=vmem, size = 0x12000, scoped, tag = 'internal scratch']
  %s0 = inlined_call_operand.vmem [shape: f32[32,128], index: 0, kind: input, shape index: {}]
  %s1 = inlined_call_operand.vmem [shape: f32[128,256], index: 1, kind: input, shape index: {}]
  %s2 = inlined_call_operand.vmem [shape: f32[1,256], index: 2, kind: input, shape index: {}]
  %s3 = inlined_call_operand.vmem [shape: f32[256,8], index: 3, kind: input, shape index: {}]
  %s4 = inlined_call_operand.vmem [shape: f32[32,8], index: 4, kind: output, shape index: {}]
  %s5 = sld [smem:[#allocation0]]
  $region49: #{forward.1} parent=0
    _
  %s7 = ssub.s32 1, %s5
  %s8 = scalar_select 0, %s7, %s5
  loop: start=0, step=1, limit=4
  $region2: #{forward.1} parent=0 // loop_pre_header
    _
  $region3: #{forward.1} parent=0 // loop_header
    %s10 = sphi 0, %s14
    %p11 = scmp.ge.s32.totalorder %s10, 4
    %s20 = sphi 0, %s22
    %s23 = sphi 0, %s20
    %s24 = sphi 0, %s23
    %s40 = sphi 0, %s24
    %s44 = sphi 0, %s44
    %s46 = sphi 0, %s44
    %s47 = sphi 0, %s46
    %s61 = sphi 0, %s47
    %s65 = sphi 0, %s65
    %s67 = sphi 0, %s65
    %s68 = sphi 0, %s67
    %s82 = sphi 0, %s68
    %s86 = sphi 0, %s86
    %s88 = sphi 0, %s86
    %s89 = sphi 0, %s88
    %s103 = sphi 0, %s89
    %s109 = sphi 0, %s111
    %s112 = sphi 0, %s109
    %s113 = sphi 0, %s112
    %s129 = sphi 0, %s113
  $region4: #{forward.1} parent=0 // loop_header_branch
    %13 = sbr.rel (%p11) target = $region8
  $region5: #{forward.1} parent=0 // loop_body
    %s15 = ssub.s32 %s10, 1
    %s16 = ssub.s32 %s10, 2
    %s17 = sadd.s32 %s10, 1
    %s18 = ssub.s32 %s10, %s17
    %p19 = scmp.eq.s32.totalorder %s18, 0
    %s21 = sadd.s32 %s20, 1
    %s22 = scalar_select %p19, %s20, %s21
    %p25 = pneg %p19
    %p26 = scmp.eq.s32.totalorder %s10, 1
    %p27 = por %p25, %p26
    %p28 = scmp.ne.s32.totalorder %s20, %s23
    %p29 = scmp.eq.s32.totalorder %s10, 0
    %p30 = por %p28, %p29
    %p31 = scmp.ne.s32.totalorder %s20, %s23
    %p32 = scmp.eq.s32.totalorder %s15, 1
    %p33 = por %p31, %p32
    %p34 = scmp.ne.s32.totalorder %s23, %s24
    %p35 = scmp.eq.s32.totalorder %s15, 0
    %p36 = por %p34, %p35
    %p37 = scmp.ne.s32.totalorder %s23, %s24
    %p38 = scmp.eq.s32.totalorder %s16, 1
    %p39 = por %p37, %p38
    %p41 = scmp.ne.s32.totalorder %s24, %s40
    %p42 = scmp.eq.s32.totalorder %s16, 0
    %p43 = por %p41, %p42
    %s45 = sadd.s32 %s44, 1
    %p48 = scmp.eq.s32.totalorder %s10, 1
    %p49 = scmp.ne.s32.totalorder %s44, %s46
    %p50 = scmp.eq.s32.totalorder %s10, 0
    %p51 = por %p49, %p50
    %p52 = scmp.ne.s32.totalorder %s44, %s46
    %p53 = scmp.eq.s32.totalorder %s15, 1
    %p54 = por %p52, %p53
    %p55 = scmp.ne.s32.totalorder %s46, %s47
    %p56 = scmp.eq.s32.totalorder %s15, 0
    %p57 = por %p55, %p56
    %p58 = scmp.ne.s32.totalorder %s46, %s47
    %p59 = scmp.eq.s32.totalorder %s16, 1
    %p60 = por %p58, %p59
    %p62 = scmp.ne.s32.totalorder %s47, %s61
    %p63 = scmp.eq.s32.totalorder %s16, 0
    %p64 = por %p62, %p63
    %s66 = sadd.s32 %s65, 1
    %p69 = scmp.eq.s32.totalorder %s10, 1
    %p70 = scmp.ne.s32.totalorder %s65, %s67
    %p71 = scmp.eq.s32.totalorder %s10, 0
    %p72 = por %p70, %p71
    %p73 = scmp.ne.s32.totalorder %s65, %s67
    %p74 = scmp.eq.s32.totalorder %s15, 1
    %p75 = por %p73, %p74
    %p76 = scmp.ne.s32.totalorder %s67, %s68
    %p77 = scmp.eq.s32.totalorder %s15, 0
    %p78 = por %p76, %p77
    %p79 = scmp.ne.s32.totalorder %s67, %s68
    %p80 = scmp.eq.s32.totalorder %s16, 1
    %p81 = por %p79, %p80
    %p83 = scmp.ne.s32.totalorder %s68, %s82
    %p84 = scmp.eq.s32.totalorder %s16, 0
    %p85 = por %p83, %p84
    %s87 = sadd.s32 %s86, 1
    %p90 = scmp.eq.s32.totalorder %s10, 1
    %p91 = scmp.ne.s32.totalorder %s86, %s88
    %p92 = scmp.eq.s32.totalorder %s10, 0
    %p93 = por %p91, %p92
    %p94 = scmp.ne.s32.totalorder %s86, %s88
    %p95 = scmp.eq.s32.totalorder %s15, 1
    %p96 = por %p94, %p95
    %p97 = scmp.ne.s32.totalorder %s88, %s89
    %p98 = scmp.eq.s32.totalorder %s15, 0
    %p99 = por %p97, %p98
    %p100 = scmp.ne.s32.totalorder %s88, %s89
    %p101 = scmp.eq.s32.totalorder %s16, 1
    %p102 = por %p100, %p101
    %p104 = scmp.ne.s32.totalorder %s89, %s103
    %p105 = scmp.eq.s32.totalorder %s16, 0
    %p106 = por %p104, %p105
    %s107 = ssub.s32 %s10, %s17
    %p108 = scmp.eq.s32.totalorder %s107, 0
    %s110 = sadd.s32 %s109, 1
    %s111 = scalar_select %p108, %s109, %s110
    %p114 = pneg %p108
    %p115 = scmp.eq.s32.totalorder %s10, 1
    %p116 = por %p114, %p115
    %p117 = scmp.ne.s32.totalorder %s109, %s112
    %p118 = scmp.eq.s32.totalorder %s10, 0
    %p119 = por %p117, %p118
    %p120 = scmp.ne.s32.totalorder %s109, %s112
    %p121 = scmp.eq.s32.totalorder %s15, 1
    %p122 = por %p120, %p121
    %p123 = scmp.ne.s32.totalorder %s112, %s113
    %p124 = scmp.eq.s32.totalorder %s15, 0
    %p125 = por %p123, %p124
    %p126 = scmp.ne.s32.totalorder %s112, %s113
    %p127 = scmp.eq.s32.totalorder %s16, 1
    %p128 = por %p126, %p127
    %p130 = scmp.ne.s32.totalorder %s113, %s129
    %p131 = scmp.eq.s32.totalorder %s16, 0
    %p132 = por %p130, %p131
    %p133 = scmp.le.s32.totalorder 1, %s10
    %p134 = scmp.lt.s32.totalorder %s10, 3
    %p135 = pnand %p133, %p134
    %p136 = pneg %p135
    // Predicated region
    $region9: #{forward.1} parent=5 // pred_check
      _
    $region10: #{forward.1} parent=5 // pred_check_branch
      %138 = sbr.rel (%p135) target = $region12
    $region11: #{forward.1} parent=5 // pred_region
      %s139 = ssub.s32 %s10, 1
      // Predicated region
      $region13: #{forward.1} parent=11 // pred_check
        %p140 = pneg %p57
      $region14: #{forward.1} parent=11 // pred_check_branch
        %142 = sbr.rel (%p140) target = $region16
      $region15: #{forward.1} parent=11 // pred_region
        _
      $region16: #{forward.1} parent=11 // pred_fallthru
        _
      // Predicated region
      $region17: #{forward.1} parent=11 // pred_check
        %p143 = pneg %p78
      $region18: #{forward.1} parent=11 // pred_check_branch
        %145 = sbr.rel (%p143) target = $region20
      $region19: #{forward.1} parent=11 // pred_region
        _
      $region20: #{forward.1} parent=11 // pred_fallthru
        _
      // Predicated region
      $region21: #{forward.1} parent=11 // pred_check
        %p146 = pneg %p99
      $region22: #{forward.1} parent=11 // pred_check_branch
        %148 = sbr.rel (%p146) target = $region24
      $region23: #{forward.1} parent=11 // pred_region
        _
      $region24: #{forward.1} parent=11 // pred_fallthru
        _
    $region12: #{forward.1} parent=5 // pred_fallthru
      _
    %p149 = scmp.lt.s32.totalorder %s10, 2
    // Predicated region
    $region25: #{forward.1} parent=5 // pred_check
      %p150 = pneg %p149
    $region26: #{forward.1} parent=5 // pred_check_branch
      %152 = sbr.rel (%p150) target = $region28
    $region27: #{forward.1} parent=5 // pred_region
      // Predicated region
      $region29: #{forward.1} parent=27 // pred_check
        %p153 = pneg %p30
      $region30: #{forward.1} parent=27 // pred_check_branch
        %155 = sbr.rel (%p153) target = $region32
      $region31: #{forward.1} parent=27 // pred_region
        %s156 = smul.u32 2, %s10
        %p157 = scmp.lt.s32.totalorder %s156, 3
        %s158 = scalar_select %p157, %s156, 3
        %s159 = smul.addr %s158, 8
        %s160 = scalar_lea.vmem %s0, %s159
        %s161 = smul.u32 2, %s10
      $region32: #{forward.1} parent=27 // pred_fallthru
        _
    $region28: #{forward.1} parent=5 // pred_fallthru
      _
    %p162 = scmp.le.s32.totalorder 1, %s10
    %p163 = scmp.lt.s32.totalorder %s10, 3
    %p164 = pnand %p162, %p163
    %p165 = pneg %p164
    // Predicated region
    $region33: #{forward.1} parent=5 // pred_check
      _
    $region34: #{forward.1} parent=5 // pred_check_branch
      %167 = sbr.rel (%p164) target = $region36
    $region35: #{forward.1} parent=5 // pred_region
      %s168 = ssub.s32 %s10, 1
      %s169 = smul.u32 2, %s15
      %p170 = scmp.lt.s32.totalorder %s169, 3
      %s171 = scalar_select %p170, %s169, 3
      %s172 = smul.addr %s171, 8
      %s173 = scalar_lea.vmem %s0, %s172
      %p174 = pneg %p36
      %p175 = pneg %p33
      %p176 = pneg %p57
      %p177 = pneg %p54
      %p178 = pneg %p78
      %p179 = pneg %p75
      %p180 = pneg %p99
      %p181 = pneg %p96
      %p182 = pneg %p125
      %p183 = pneg %p122
      %s184 = smul.u32 2, %s15
      %p185 = scmp.lt.s32.totalorder %s184, 3
      %s186 = scalar_select %p185, %s184, 3
      %s187 = smul.addr %s186, 8
      %s188 = scalar_lea.vmem %s4, %s187
      %s189 = smul.u32 2, %s15
      %p190 = scmp.lt.s32.totalorder %s189, 3
      %s191 = scalar_select %p190, %s189, 3
      %s192 = smul.addr %s191, 8
      %s193 = scalar_lea.vmem %s0, %s192
      %s194 = smul.u32 2, %s15
      %s195 = smul.u32 2, %s15
      %p196 = scmp.lt.s32.totalorder %s195, 3
      %s197 = scalar_select %p196, %s195, 3
      %s198 = smul.addr %s197, 8
      %s199 = scalar_lea.vmem %s4, %s198
      %s200 = smul.u32 2, %s15
      %v201 = vld [vmem:[%s193] sm:$0xff]
      %v202 = vld [vmem:[%s193 + $0x8] sm:$0xff]
      %v203 = vld [vmem:[%s1] sm:$0xff]
      %v204 = vld [vmem:[%s1 + $0x8] sm:$0xff]
      %v205 = vld [vmem:[%s1 + $0x10] sm:$0xff]
      %v206 = vld [vmem:[%s1 + $0x18] sm:$0xff]
      %v207 = vld [vmem:[%s1 + $0x20] sm:$0xff]
      %v208 = vld [vmem:[%s1 + $0x28] sm:$0xff]
      %v209 = vld [vmem:[%s1 + $0x30] sm:$0xff]
      %v210 = vld [vmem:[%s1 + $0x38] sm:$0xff]
      %v211 = vld [vmem:[%s1 + $0x40] sm:$0xff]
      %v212 = vld [vmem:[%s1 + $0x48] sm:$0xff]
      %v213 = vld [vmem:[%s1 + $0x50] sm:$0xff]
      %v214 = vld [vmem:[%s1 + $0x58] sm:$0xff]
      %v215 = vld [vmem:[%s1 + $0x60] sm:$0xff]
      %v216 = vld [vmem:[%s1 + $0x68] sm:$0xff]
      %v217 = vld [vmem:[%s1 + $0x70] sm:$0xff]
      %v218 = vld [vmem:[%s1 + $0x78] sm:$0xff]
      %v219 = vld [vmem:[%s1 + $0x80] sm:$0xff]
      %v220 = vld [vmem:[%s1 + $0x88] sm:$0xff]
      %v221 = vld [vmem:[%s1 + $0x90] sm:$0xff]
      %v222 = vld [vmem:[%s1 + $0x98] sm:$0xff]
      %v223 = vld [vmem:[%s1 + $0xa0] sm:$0xff]
      %v224 = vld [vmem:[%s1 + $0xa8] sm:$0xff]
      %v225 = vld [vmem:[%s1 + $0xb0] sm:$0xff]
      %v226 = vld [vmem:[%s1 + $0xb8] sm:$0xff]
      %v227 = vld [vmem:[%s1 + $0xc0] sm:$0xff]
      %v228 = vld [vmem:[%s1 + $0xc8] sm:$0xff]
      %v229 = vld [vmem:[%s1 + $0xd0] sm:$0xff]
      %v230 = vld [vmem:[%s1 + $0xd8] sm:$0xff]
      %v231 = vld [vmem:[%s1 + $0xe0] sm:$0xff]
      %v232 = vld [vmem:[%s1 + $0xe8] sm:$0xff]
      %v233 = vld [vmem:[%s1 + $0xf0] sm:$0xff]
      %v234 = vld [vmem:[%s1 + $0xf8] sm:$0xff]
      %v235 = vld [vmem:[%s2] sm:$0x3]
      %v237 = vlaneseq
      %v238 = vshrl.u32 %v237, 7
      %v239 = vsub.s32 0, %v238
      %v240 = vrot.slane %v235, %v239
      %v241 = vlaneseq
      %v242 = vshrl.u32 %v241, 7
      %v243 = vsub.s32 1, %v242
      %v244 = vrot.slane %v235, %v243
      %247 = vmatprep.subr.mxu0 %v204
      %248 = vmatpush1.msra.mxu0 %v203
      %249 = vmatprep.subr.mxu0 %v206
      %250 = vmatpush1.msra.mxu0 %v205
      %251 = vmatprep.subr.mxu0 %v208
      %252 = vmatpush1.msra.mxu0 %v207
      %253 = vmatprep.subr.mxu0 %v210
      %254 = vmatpush1.msra.mxu0 %v209
      %255 = vmatprep.subr.mxu0 %v212
      %256 = vmatpush1.msra.mxu0 %v211
      %257 = vmatprep.subr.mxu0 %v214
      %258 = vmatpush1.msra.mxu0 %v213
      %259 = vmatprep.subr.mxu0 %v216
      %260 = vmatpush1.msra.mxu0 %v215
      %261 = vmatprep.subr.mxu0 %v218
      %262 = vmatpush1.msra.mxu0 %v217
      %263 = vmatprep.subr.mxu0 %v220
      %264 = vmatpush1.msra.mxu0 %v219
      %265 = vmatprep.subr.mxu0 %v222
      %266 = vmatpush1.msra.mxu0 %v221
      %267 = vmatprep.subr.mxu0 %v224
      %268 = vmatpush1.msra.mxu0 %v223
      %269 = vmatprep.subr.mxu0 %v226
      %270 = vmatpush1.msra.mxu0 %v225
      %271 = vmatprep.subr.mxu0 %v228
      %272 = vmatpush1.msra.mxu0 %v227
      %273 = vmatprep.subr.mxu0 %v230
      %274 = vmatpush1.msra.mxu0 %v229
      %275 = vmatprep.subr.mxu0 %v232
      %276 = vmatpush1.msra.mxu0 %v231
      %277 = vmatprep.subr.mxu0 %v234
      %278 = vmatpush1.msra.mxu0 %v233
      %279 = vmatprep.subr.mxu0 0.0
      %280 = vmatpush1.msra.mxu0 0.0
      %281 = vmatprep.subr.mxu0 0.0
      %282 = vmatpush1.msra.mxu0 0.0
      %283 = vmatprep.subr.mxu0 0.0
      %284 = vmatpush1.msra.mxu0 0.0
      %285 = vmatprep.subr.mxu0 0.0
      %286 = vmatpush1.msra.mxu0 0.0
      %287 = vmatprep.subr.mxu0 0.0
      %288 = vmatpush1.msra.mxu0 0.0
      %289 = vmatprep.subr.mxu0 0.0
      %290 = vmatpush1.msra.mxu0 0.0
      %291 = vmatprep.subr.mxu0 0.0
      %292 = vmatpush1.msra.mxu0 0.0
      %293 = vmatprep.subr.mxu0 0.0
      %294 = vmatpush1.msra.mxu0 0.0
      %295 = vmatprep.subr.mxu0 0.0
      %296 = vmatpush1.msra.mxu0 0.0
      %297 = vmatprep.subr.mxu0 0.0
      %298 = vmatpush1.msra.mxu0 0.0
      %299 = vmatprep.subr.mxu0 0.0
      %300 = vmatpush1.msra.mxu0 0.0
      %301 = vmatprep.subr.mxu0 0.0
      %302 = vmatpush1.msra.mxu0 0.0
      %303 = vmatprep.subr.mxu0 0.0
      %304 = vmatpush1.msra.mxu0 0.0
      %305 = vmatprep.subr.mxu0 0.0
      %306 = vmatpush1.msra.mxu0 0.0
      %307 = vmatprep.subr.mxu0 0.0
      %308 = vmatpush1.msra.mxu0 0.0
      %309 = vmatprep.subr.mxu0 0.0
      %310 = vmatpush1.msra.mxu0 0.0
      %311 = vmatprep.mubr.f32.mxu0 0.0
      %312 = vmatmul.mubr.f32.gmra.mrb[0].mxu0 %v201
      %v313 = vpop.f32.mrb[0].mxu0
      %v314 = vadd.f32 %v240, %v313
      %v315 = vpop.f32.mrb[0].mxu0
      %v316 = vadd.f32 %v244, %v315
      %317 = vmatprep.mubr.f32.mxu0 0.0
      %318 = vmatmul.mubr.f32.gmra.mrb[0].mxu0 %v202
      %v319 = vpop.f32.mrb[0].mxu0
      %v320 = vadd.f32 %v240, %v319
      %v321 = vpop.f32.mrb[0].mxu0
      %v322 = vadd.f32 %v244, %v321
      %323 = vdwg.mxu0
      %v324 = vmax.f32 %v314, 0.0
      %v325 = vmax.f32 %v316, 0.0
      %v326 = vmax.f32 %v320, 0.0
      %v327 = vmax.f32 %v322, 0.0
      %v328 = vld [vmem:[%s3] sm:$0xff]
      %v329 = vld [vmem:[%s3 + $0x8] sm:$0xff]
      %v330 = vld [vmem:[%s3 + $0x10] sm:$0xff]
      %v331 = vld [vmem:[%s3 + $0x18] sm:$0xff]
      %v332 = vld [vmem:[%s3 + $0x20] sm:$0xff]
      %v333 = vld [vmem:[%s3 + $0x28] sm:$0xff]
      %v334 = vld [vmem:[%s3 + $0x30] sm:$0xff]
      %v335 = vld [vmem:[%s3 + $0x38] sm:$0xff]
      %v336 = vld [vmem:[%s3 + $0x40] sm:$0xff]
      %v337 = vld [vmem:[%s3 + $0x48] sm:$0xff]
      %v338 = vld [vmem:[%s3 + $0x50] sm:$0xff]
      %v339 = vld [vmem:[%s3 + $0x58] sm:$0xff]
      %v340 = vld [vmem:[%s3 + $0x60] sm:$0xff]
      %v341 = vld [vmem:[%s3 + $0x68] sm:$0xff]
      %v342 = vld [vmem:[%s3 + $0x70] sm:$0xff]
      %v343 = vld [vmem:[%s3 + $0x78] sm:$0xff]
      %v344 = vld [vmem:[%s3 + $0x80] sm:$0xff]
      %v345 = vld [vmem:[%s3 + $0x88] sm:$0xff]
      %v346 = vld [vmem:[%s3 + $0x90] sm:$0xff]
      %v347 = vld [vmem:[%s3 + $0x98] sm:$0xff]
      %v348 = vld [vmem:[%s3 + $0xa0] sm:$0xff]
      %v349 = vld [vmem:[%s3 + $0xa8] sm:$0xff]
      %v350 = vld [vmem:[%s3 + $0xb0] sm:$0xff]
      %v351 = vld [vmem:[%s3 + $0xb8] sm:$0xff]
      %v352 = vld [vmem:[%s3 + $0xc0] sm:$0xff]
      %v353 = vld [vmem:[%s3 + $0xc8] sm:$0xff]
      %v354 = vld [vmem:[%s3 + $0xd0] sm:$0xff]
      %v355 = vld [vmem:[%s3 + $0xd8] sm:$0xff]
      %v356 = vld [vmem:[%s3 + $0xe0] sm:$0xff]
      %v357 = vld [vmem:[%s3 + $0xe8] sm:$0xff]
      %v358 = vld [vmem:[%s3 + $0xf0] sm:$0xff]
      %v359 = vld [vmem:[%s3 + $0xf8] sm:$0xff]
      %360 = vmatprep.subr.mxu0 0.0
      %361 = vmatpush1.msra.mxu0 %v328
      %362 = vmatprep.subr.mxu0 0.0
      %363 = vmatpush1.msra.mxu0 %v329
      %364 = vmatprep.subr.mxu0 0.0
      %365 = vmatpush1.msra.mxu0 %v330
      %366 = vmatprep.subr.mxu0 0.0
      %367 = vmatpush1.msra.mxu0 %v331
      %368 = vmatprep.subr.mxu0 0.0
      %369 = vmatpush1.msra.mxu0 %v332
      %370 = vmatprep.subr.mxu0 0.0
      %371 = vmatpush1.msra.mxu0 %v333
      %372 = vmatprep.subr.mxu0 0.0
      %373 = vmatpush1.msra.mxu0 %v334
      %374 = vmatprep.subr.mxu0 0.0
      %375 = vmatpush1.msra.mxu0 %v335
      %376 = vmatprep.subr.mxu0 0.0
      %377 = vmatpush1.msra.mxu0 %v336
      %378 = vmatprep.subr.mxu0 0.0
      %379 = vmatpush1.msra.mxu0 %v337
      %380 = vmatprep.subr.mxu0 0.0
      %381 = vmatpush1.msra.mxu0 %v338
      %382 = vmatprep.subr.mxu0 0.0
      %383 = vmatpush1.msra.mxu0 %v339
      %384 = vmatprep.subr.mxu0 0.0
      %385 = vmatpush1.msra.mxu0 %v340
      %386 = vmatprep.subr.mxu0 0.0
      %387 = vmatpush1.msra.mxu0 %v341
      %388 = vmatprep.subr.mxu0 0.0
      %389 = vmatpush1.msra.mxu0 %v342
      %390 = vmatprep.subr.mxu0 0.0
      %391 = vmatpush1.msra.mxu0 %v343
      %392 = vmatprep.subr.mxu0 0.0
      %393 = vmatpush1.msra.mxu0 %v344
      %394 = vmatprep.subr.mxu0 0.0
      %395 = vmatpush1.msra.mxu0 %v345
      %396 = vmatprep.subr.mxu0 0.0
      %397 = vmatpush1.msra.mxu0 %v346
      %398 = vmatprep.subr.mxu0 0.0
      %399 = vmatpush1.msra.mxu0 %v347
      %400 = vmatprep.subr.mxu0 0.0
      %401 = vmatpush1.msra.mxu0 %v348
      %402 = vmatprep.subr.mxu0 0.0
      %403 = vmatpush1.msra.mxu0 %v349
      %404 = vmatprep.subr.mxu0 0.0
      %405 = vmatpush1.msra.mxu0 %v350
      %406 = vmatprep.subr.mxu0 0.0
      %407 = vmatpush1.msra.mxu0 %v351
      %408 = vmatprep.subr.mxu0 0.0
      %409 = vmatpush1.msra.mxu0 %v352
      %410 = vmatprep.subr.mxu0 0.0
      %411 = vmatpush1.msra.mxu0 %v353
      %412 = vmatprep.subr.mxu0 0.0
      %413 = vmatpush1.msra.mxu0 %v354
      %414 = vmatprep.subr.mxu0 0.0
      %415 = vmatpush1.msra.mxu0 %v355
      %416 = vmatprep.subr.mxu0 0.0
      %417 = vmatpush1.msra.mxu0 %v356
      %418 = vmatprep.subr.mxu0 0.0
      %419 = vmatpush1.msra.mxu0 %v357
      %420 = vmatprep.subr.mxu0 0.0
      %421 = vmatpush1.msra.mxu0 %v358
      %422 = vmatprep.subr.mxu0 0.0
      %423 = vmatpush1.msra.mxu0 %v359
      %424 = vmatprep.mubr.f32.mxu0 %v325
      %425 = vmatmul.mubr.f32.gmra.mrb[0].mxu0 %v324
      %v426 = vpop.f32.mrb[0].mxu0
      %v427 = vadd.f32 -0.17172, %v426
      %v428 = vpop.f32.mrb[0].mxu0
      %429 = vmatprep.mubr.f32.mxu0 %v327
      %430 = vmatmul.mubr.f32.gmra.mrb[0].mxu0 %v326
      %v431 = vpop.f32.mrb[0].mxu0
      %v432 = vadd.f32 -0.17172, %v431
      %v433 = vpop.f32.mrb[0].mxu0
      %434 = vdwg.mxu0
      %v435 = vand.u32 2147483647, %v427
      %v436 = vand.u32 2147483647, %v432
      %v437 = vsub.f32 0.0, %v435
      %v438 = vsub.f32 0.0, %v436
      %v439 = vmul.f32 %v437, 1.442695
      %v440 = vpow.pop %v439
      %v441 = vmul.f32 %v438, 1.442695
      %v442 = vpow.pop %v441
      %v443 = vadd.f32 %v440, 1.0
      %v444 = vadd.f32 %v442, 1.0
      %v445 = vrcp.pop %v443
      %v446 = vmul.f32 1.0, %v445
      %v447 = vrcp.pop %v444
      %v448 = vmul.f32 1.0, %v447
      %vm449 = vcmp.ge.f32.partialorder %v427, 0.0
      %vm450 = vcmp.ge.f32.partialorder %v432, 0.0
      %v451 = vmul.f32 %v440, %v446
      %v452 = vmul.f32 %v442, %v448
      %v453 = vsel %vm449, %v446, %v451
      %v454 = vsel %vm450, %v448, %v452
      %vm455 = vcmask 64512
      %456 = vst.msk [vmem:[%s199] sm:$0xff] %vm455, %v453
      %457 = vst.msk [vmem:[%s199 + $0x8] sm:$0xff] %vm455, %v454
      %s458 = smul.u32 2, %s15
      %p459 = scmp.lt.s32.totalorder %s458, 3
      %s460 = scalar_select %p459, %s458, 3
      %s461 = smul.addr %s460, 8
      %s462 = scalar_lea.vmem %s4, %s461
      // Predicated region
      $region37: #{forward.1} parent=35 // pred_check
        %p463 = pneg %p122
      $region38: #{forward.1} parent=35 // pred_check_branch
        %465 = sbr.rel (%p463) target = $region40
      $region39: #{forward.1} parent=35 // pred_region
        %s466 = smul.u32 2, %s15
      $region40: #{forward.1} parent=35 // pred_fallthru
        _
    $region36: #{forward.1} parent=5 // pred_fallthru
      _
    %p467 = scmp.le.s32.totalorder 2, %s10
    // Predicated region
    $region41: #{forward.1} parent=5 // pred_check
      %p468 = pneg %p467
    $region42: #{forward.1} parent=5 // pred_check_branch
      %470 = sbr.rel (%p468) target = $region44
    $region43: #{forward.1} parent=5 // pred_region
      %s471 = ssub.s32 %s10, 2
      // Predicated region
      $region45: #{forward.1} parent=43 // pred_check
        %p472 = pneg %p128
      $region46: #{forward.1} parent=43 // pred_check_branch
        %474 = sbr.rel (%p472) target = $region48
      $region47: #{forward.1} parent=43 // pred_region
        %s475 = smul.u32 2, %s16
        %p476 = scmp.lt.s32.totalorder %s475, 3
        %s477 = scalar_select %p476, %s475, 3
        %s478 = smul.addr %s477, 8
        %s479 = scalar_lea.vmem %s4, %s478
      $region48: #{forward.1} parent=43 // pred_fallthru
        _
    $region44: #{forward.1} parent=5 // pred_fallthru
      _
  $region6: #{forward.1} parent=0 // loop_footer
    %s14 = sadd.s32 1, %s10
  $region7: #{forward.1} parent=0 // loop_footer_branch
    %9 = sbr.rel target = $region3
  $region8: #{forward.1} parent=0 // loop_exit
    _

</llo_original>
